<compile_context>
chip_gen: v6e
topology: v6e:2x2x1
jax: 0.10.0
libtpu: 0.0.40
codegen_flags: <defaults>
</compile_context>

<pallas_src>
import jax
import jax.numpy as jnp
import numpy as np
from jax.experimental import pallas as pl
from jax.experimental.pallas import tpu as pltpu

IN_DIM = 256      # nn.Linear(256, nz_cond)
HID_DIM = 100     # nz_cond
OUT_DIM = 100     # nz_cond
LANE = 128
SUBLANE = 8


def _round_up(x, m):
    return (x + m - 1) // m * m


# ------------------------------ Pallas kernel ------------------------------ #
def _mlp_kernel(x_ref, w1_ref, b1_ref, w2_ref, b2_ref, o_ref):
    # Fused Linear -> ReLU -> Linear on one M tile.  Both dots hit the MXU
    # with an f32 accumulator; bias/ReLU epilogue stays in f32 on the VPU.
    # The hidden activation never leaves VMEM.
    h = jnp.dot(x_ref[...], w1_ref[...], preferred_element_type=jnp.float32)
    h = jnp.maximum(h + b1_ref[...], 0.0)
    y = jnp.dot(h, w2_ref[...], preferred_element_type=jnp.float32) + b2_ref[...]
    o_ref[...] = y.astype(o_ref.dtype)


# --------------------------- One-time param prep ---------------------------- #
def prepare_params(raw):
    """Pre-transpose and lane-pad weights/biases ONCE (hoisted out of forward).

    Padded hidden columns stay exactly 0 through ReLU and feed zero rows of
    W2, and padded output columns get zero weights + zero bias, so padding
    never changes the numerics (padded output cols are exactly 0).
    """
    w1, b1, w2, b2 = raw["w1"], raw["b1"], raw["w2"], raw["b2"]
    hid_p = _round_up(HID_DIM, LANE)   # 128: lane-dense hidden
    out_p = _round_up(OUT_DIM, LANE)   # 128: lane-dense output (unmasked vst)
    w1p = jnp.zeros((IN_DIM, hid_p), jnp.float32).at[:, :HID_DIM].set(w1.T)
    b1p = jnp.zeros((1, hid_p), jnp.float32).at[:, :HID_DIM].set(b1)
    w2p = jnp.zeros((hid_p, out_p), jnp.float32).at[:HID_DIM, :OUT_DIM].set(w2.T)
    b2p = jnp.zeros((1, out_p), jnp.float32).at[:, :OUT_DIM].set(b2)
    return {"w1p": w1p, "b1p": b1p, "w2p": w2p, "b2p": b2p}


def _choose_tile_m(B, tile_m):
    """Pick an 8-aligned M tile; ensure >=2 tiles when there is enough work
    so the 'parallel' grid axis can feed both v7x TensorCores (harmless on
    v5e/v6e, which have a single TC)."""
    mp = _round_up(max(B, SUBLANE), SUBLANE)
    tm = min(tile_m, mp)
    if mp >= 2 * SUBLANE:
        half = _round_up(pl.cdiv(mp, 2), SUBLANE)
        tm = min(tm, max(SUBLANE, half))
    return tm


# ------------------------------- Host wrapper ------------------------------ #
def mlp_forward_padded(prepped, x, *, tile_m=1024):
    """x: (B, 256) f32 -> (B, 128) f32; columns [100:128] are exactly zero.

    Preferred entry point for fusion with downstream consumers (avoids the
    non-contiguous column-slice copy of an already memory-bound op).
    """
    B, K = x.shape
    assert K == IN_DIM
    w1p, b1p = prepped["w1p"], prepped["b1p"]
    w2p, b2p = prepped["w2p"], prepped["b2p"]
    hid_p, out_p = w1p.shape[1], w2p.shape[1]

    tm = _choose_tile_m(B, tile_m)
    grid = (pl.cdiv(B, tm),)   # ragged last block handled by Pallas; no x pad

    flops = 2 * B * (IN_DIM * hid_p + hid_p * out_p)
    bytes_accessed = 4 * (B * IN_DIM + IN_DIM * hid_p + hid_p
                          + hid_p * out_p + out_p + B * out_p)

    # VMEM budget @ tm=1024: 2x x-tile (2 MiB) + 2x out-tile (1 MiB)
    # + f32 hidden intermediate (0.5 MiB) + resident weights (~0.2 MiB)
    # ≈ 4 MiB -- comfortably inside the 32 MiB limit on every generation.
    out = pl.pallas_call(
        _mlp_kernel,
        out_shape=jax.ShapeDtypeStruct((B, out_p), jnp.float32),
        grid=grid,
        in_specs=[
            # x tile, pipelined over M.  (If profiling shows exposed DMA on
            # v5e, add pipeline_mode=pl.Buffered(3) here.)
            pl.BlockSpec((tm, IN_DIM), lambda i: (i, 0)),
            pl.BlockSpec((IN_DIM, hid_p), lambda i: (0, 0)),   # whole W1, resident
            pl.BlockSpec((1, hid_p), lambda i: (0, 0)),        # b1
            pl.BlockSpec((hid_p, out_p), lambda i: (0, 0)),    # whole W2, resident
            pl.BlockSpec((1, out_p), lambda i: (0, 0)),        # b2
        ],
        out_specs=pl.BlockSpec((tm, out_p), lambda i: (i, 0)),
        compiler_params=pltpu.CompilerParams(
            dimension_semantics=("parallel",),        # v7x: shard M tiles across 2 TCs
            vmem_limit_bytes=32 * 1024 * 1024,        # headroom on v7x's 64 MiB VMEM
        ),
        cost_estimate=pl.CostEstimate(
            flops=flops, transcendentals=0, bytes_accessed=bytes_accessed),
    )(x, w1p, b1p, w2p, b2p)
    return out


def mlp_forward(prepped, x, *, tile_m=1024):
    """x: (B, 256) f32 -> (B, 100) f32, matching MLP_class.forward exactly.
    The column trim is an extra copy; prefer mlp_forward_padded when the
    consumer can fuse/ignore the zero padding."""
    return mlp_forward_padded(prepped, x, tile_m=tile_m)[:, :OUT_DIM]


# -------------------------- Params & pure-JAX ref --------------------------- #
def init_params(key):
    # PyTorch-Linear-style uniform init (deterministic given the key).
    k1, k2, k3, k4 = jax.random.split(key, 4)
    bound1 = 1.0 / np.sqrt(IN_DIM)
    bound2 = 1.0 / np.sqrt(HID_DIM)
    return {
        "w1": jax.random.uniform(k1, (HID_DIM, IN_DIM), jnp.float32, -bound1, bound1),
        "b1": jax.random.uniform(k2, (HID_DIM,), jnp.float32, -bound1, bound1),
        "w2": jax.random.uniform(k3, (OUT_DIM, HID_DIM), jnp.float32, -bound2, bound2),
        "b2": jax.random.uniform(k4, (OUT_DIM,), jnp.float32, -bound2, bound2),
    }


def mlp_reference(params, x):
    h = jnp.maximum(x @ params["w1"].T + params["b1"], 0.0)
    return h @ params["w2"].T + params["b2"]


if __name__ == "__main__":
    key = jax.random.PRNGKey(0)
    k_param, k_x1, k_x2 = jax.random.split(key, 3)

    raw_params = init_params(k_param)
    prepped = prepare_params(raw_params)   # one-time weight prep (hoisted)

    # Small, sublane-aligned batch (single M tile).
    x1 = jax.random.normal(k_x1, (8, IN_DIM), jnp.float32)
    out1 = mlp_forward(prepped, x1)
    jax.block_until_ready(out1)
    assert out1.shape == (8, OUT_DIM)
    assert jnp.allclose(out1, mlp_reference(raw_params, x1), atol=1e-4, rtol=1e-4)

    # Ragged batch (not a multiple of the tile) exercising the multi-tile,
    # no-host-pad path; OOB rows of the last block are never written back.
    x2 = jax.random.normal(k_x2, (100, IN_DIM), jnp.float32)
    out2 = mlp_forward(prepped, x2)
    jax.block_until_ready(out2)
    assert out2.shape == (100, OUT_DIM)
    assert jnp.allclose(out2, mlp_reference(raw_params, x2), atol=1e-4, rtol=1e-4)

    # Padded output columns are exactly zero (safe to hand downstream).
    outp = mlp_forward_padded(prepped, x1)
    jax.block_until_ready(outp)
    assert jnp.all(outp[:, OUT_DIM:] == 0.0)

    print("KERNEL_OK")
</pallas_src>

<mosaic_0001>
module attributes {stable_mosaic.version = 11 : i64} {
  func.func @_mlp_kernel(%arg0: i32, %arg1: memref<8x256xf32, #tpu.memory_space<vmem>>, %arg2: memref<256x128xf32, #tpu.memory_space<vmem>>, %arg3: memref<1x128xf32, #tpu.memory_space<vmem>>, %arg4: memref<128x128xf32, #tpu.memory_space<vmem>>, %arg5: memref<1x128xf32, #tpu.memory_space<vmem>>, %arg6: memref<8x128xf32, #tpu.memory_space<vmem>>) attributes {dimension_semantics = [#tpu.dimension_semantics<parallel>], iteration_bounds = array<i64: 1>, scalar_prefetch = 0 : i64, scratch_operands = 0 : i64, tpu.core_type = #tpu.core_type<tc>, window_params = [{transform_indices = @transform_0, window_bounds = array<i64: 8, 256>}, {pipeline_mode = #tpu.pipeline_mode<synchronous>, transform_indices = @transform_1, window_bounds = array<i64: 256, 128>}, {pipeline_mode = #tpu.pipeline_mode<synchronous>, transform_indices = @transform_2, window_bounds = array<i64: 1, 128>}, {pipeline_mode = #tpu.pipeline_mode<synchronous>, transform_indices = @transform_3, window_bounds = array<i64: 128, 128>}, {pipeline_mode = #tpu.pipeline_mode<synchronous>, transform_indices = @transform_4, window_bounds = array<i64: 1, 128>}, {transform_indices = @transform_5, window_bounds = array<i64: 8, 128>}]} {
    %c0 = arith.constant 0 : index
    %c0_0 = arith.constant 0 : index
    %0 = vector.load %arg1[%c0, %c0_0] : memref<8x256xf32, #tpu.memory_space<vmem>>, vector<8x256xf32>
    %c0_1 = arith.constant 0 : index
    %c0_2 = arith.constant 0 : index
    %1 = vector.load %arg2[%c0_1, %c0_2] : memref<256x128xf32, #tpu.memory_space<vmem>>, vector<256x128xf32>
    %cst = arith.constant dense<0.000000e+00> : vector<8x128xf32>
    %2 = tpu.matmul %0, %1, %cst {dimension_numbers = #tpu.dot_dimension_numbers<[1], [0], [0], [1], [0, 0, 1, 1], [], []>} : vector<8x256xf32>, vector<256x128xf32>, vector<8x128xf32> -> vector<8x128xf32>
    %c0_3 = arith.constant 0 : index
    %c0_4 = arith.constant 0 : index
    %3 = vector.load %arg3[%c0_3, %c0_4] : memref<1x128xf32, #tpu.memory_space<vmem>>, vector<1x128xf32>
    %4 = vector.broadcast %3 : vector<1x128xf32> to vector<8x128xf32>
    %5 = arith.addf %2, %4 : vector<8x128xf32>
    %cst_5 = arith.constant 0.000000e+00 : f32
    %6 = vector.broadcast %cst_5 : f32 to vector<8x128xf32>
    %7 = arith.maximumf %5, %6 : vector<8x128xf32>
    %c0_6 = arith.constant 0 : index
    %c0_7 = arith.constant 0 : index
    %8 = vector.load %arg4[%c0_6, %c0_7] : memref<128x128xf32, #tpu.memory_space<vmem>>, vector<128x128xf32>
    %cst_8 = arith.constant dense<0.000000e+00> : vector<8x128xf32>
    %9 = tpu.matmul %7, %8, %cst_8 {dimension_numbers = #tpu.dot_dimension_numbers<[1], [0], [0], [1], [0, 0, 1, 1], [], []>} : vector<8x128xf32>, vector<128x128xf32>, vector<8x128xf32> -> vector<8x128xf32>
    %c0_9 = arith.constant 0 : index
    %c0_10 = arith.constant 0 : index
    %10 = vector.load %arg5[%c0_9, %c0_10] : memref<1x128xf32, #tpu.memory_space<vmem>>, vector<1x128xf32>
    %11 = vector.broadcast %10 : vector<1x128xf32> to vector<8x128xf32>
    %12 = arith.addf %9, %11 : vector<8x128xf32>
    %c0_11 = arith.constant 0 : index
    %c0_12 = arith.constant 0 : index
    %13 = vector.load %arg6[%c0_11, %c0_12] : memref<8x128xf32, #tpu.memory_space<vmem>>, vector<8x128xf32>
    tpu.vector_store %arg6[%c0_11, %c0_12], %12 {strides = array<i32>} : memref<8x128xf32, #tpu.memory_space<vmem>>, vector<8x128xf32>,
    return
  }
  func.func @transform_0(%arg0: i32) -> (i32, i32) {
    %c0_i32 = arith.constant 0 : i32
    %c0_i32_0 = arith.constant 0 : i32
    return %arg0, %c0_i32 : i32, i32
  }
  func.func @transform_1(%arg0: i32) -> (i32, i32) {
    %c0_i32 = arith.constant 0 : i32
    %c0_i32_0 = arith.constant 0 : i32
    %c0_i32_1 = arith.constant 0 : i32
    return %c0_i32, %c0_i32_0 : i32, i32
  }
  func.func @transform_2(%arg0: i32) -> (i32, i32) {
    %c0_i32 = arith.constant 0 : i32
    %c0_i32_0 = arith.constant 0 : i32
    %c0_i32_1 = arith.constant 0 : i32
    return %c0_i32, %c0_i32_0 : i32, i32
  }
  func.func @transform_3(%arg0: i32) -> (i32, i32) {
    %c0_i32 = arith.constant 0 : i32
    %c0_i32_0 = arith.constant 0 : i32
    %c0_i32_1 = arith.constant 0 : i32
    return %c0_i32, %c0_i32_0 : i32, i32
  }
  func.func @transform_4(%arg0: i32) -> (i32, i32) {
    %c0_i32 = arith.constant 0 : i32
    %c0_i32_0 = arith.constant 0 : i32
    %c0_i32_1 = arith.constant 0 : i32
    return %c0_i32, %c0_i32_0 : i32, i32
  }
  func.func @transform_5(%arg0: i32) -> (i32, i32) {
    %c0_i32 = arith.constant 0 : i32
    %c0_i32_0 = arith.constant 0 : i32
    return %arg0, %c0_i32 : i32, i32
  }
}

</mosaic_0001>

<llo_original>
// kernel: tpu_custom_call.1
$region0: #{tpu_custom_call.1}
  #allocation0 [shape = 'u32[]', space=smem, size = 0x4, offset = 0x4, fixed_abs, tag = 'smem constant byte address 0x4 - core index']
  #allocation1 [shape = 'u32[144,128]{1,0:T(1,128)}', space=vmem, size = 0x12000, scoped, tag = 'internal scratch']
  %s0 = inlined_call_operand.hbm [shape: f32[8,256], index: 0, kind: input, shape index: {}]
  %s1 = inlined_call_operand.hbm [shape: f32[256,128], index: 1, kind: input, shape index: {}]
  %s2 = inlined_call_operand.vmem [shape: f32[1,128], index: 2, kind: input, shape index: {}]
  %s3 = inlined_call_operand.hbm [shape: f32[128,128], index: 3, kind: input, shape index: {}]
  %s4 = inlined_call_operand.vmem [shape: f32[1,128], index: 4, kind: input, shape index: {}]
  %s5 = inlined_call_operand.hbm [shape: f32[8,128], index: 5, kind: output, shape index: {}]
  %s6 = sld [smem:[#allocation0]]
  $region42: #{tpu_custom_call.1} parent=0
    _
  %s8 = ssub.s32 1, %s6
  %s9 = scalar_select 0, %s8, %s6
  $region1: #{tpu_custom_call.1} parent=0
    #allocation2 [shape = 'u8[8192]{0}', space=vmem, size = 0x2000, scoped, tag = 'input window, operand 0, single buffered']
    #allocation3 [shape = 's32[1]{0}', space=sflag, size = 0x4, scoped, tag = 'scoped memory for tpu_custom_call.1']
    #allocation4 [shape = 's32[1]{0}', space=sflag, size = 0x4, scoped, tag = 'scoped memory for tpu_custom_call.1']
    #allocation5 [shape = 'u8[131072]{0}', space=vmem, size = 0x20000, scoped, tag = 'input window, operand 1, single buffered']
    #allocation6 [shape = 's32[1]{0}', space=sflag, size = 0x4, scoped, tag = 'scoped memory for tpu_custom_call.1']
    #allocation7 [shape = 'u8[65536]{0}', space=vmem, size = 0x10000, scoped, tag = 'input window, operand 3, single buffered']
    #allocation8 [shape = 'u8[4096]{0}', space=vmem, size = 0x1000, scoped, tag = 'output window, operand 0, single buffered']
    %10 = vsyncpa [#allocation3], 0
    %11 = vsyncpa [#allocation6], 0
    %12 = vsyncpa [#allocation4], 0
    // Predicated region
    $region2: #{tpu_custom_call.1} parent=1 // pred_check
      _
    $region3: #{tpu_custom_call.1} parent=1 // pred_check_branch
      %14 = sbr.rel (0) target = $region5
    $region4: #{tpu_custom_call.1} parent=1 // pred_region
      %s16 = ssub.s32 256, 256
      %17 = vsyncadd [#allocation3], %s16
      %s19 = sshll.u32 [#allocation2], 4
      %s20 = int_to_ptr.vmem [resolvable:$true] %s19
      %22 = dma.hbm_to_vmem [thread:$0]  %s0, 256, %s20, [#allocation3]
    $region5: #{tpu_custom_call.1} parent=1 // pred_fallthru
      _
    // Predicated region
    $region6: #{tpu_custom_call.1} parent=1 // pred_check
      _
    $region7: #{tpu_custom_call.1} parent=1 // pred_check_branch
      %24 = sbr.rel (0) target = $region9
    $region8: #{tpu_custom_call.1} parent=1 // pred_region
      %s26 = ssub.s32 4096, 4096
      %27 = vsyncadd [#allocation6], %s26
      %s28 = sshll.u32 [#allocation5], 4
      %s29 = int_to_ptr.vmem [resolvable:$true] %s28
      %34 = dma.hbm_to_vmem [thread:$0]  %s1, 4096, %s29, [#allocation6], 128, 128, 8
    $region9: #{tpu_custom_call.1} parent=1 // pred_fallthru
      _
    // Predicated region
    $region10: #{tpu_custom_call.1} parent=1 // pred_check
      _
    $region11: #{tpu_custom_call.1} parent=1 // pred_check_branch
      %36 = sbr.rel (0) target = $region13
    $region12: #{tpu_custom_call.1} parent=1 // pred_region
      _
    $region13: #{tpu_custom_call.1} parent=1 // pred_fallthru
      _
    // Predicated region
    $region14: #{tpu_custom_call.1} parent=1 // pred_check
      _
    $region15: #{tpu_custom_call.1} parent=1 // pred_check_branch
      %38 = sbr.rel (0) target = $region17
    $region16: #{tpu_custom_call.1} parent=1 // pred_region
      %s40 = ssub.s32 2048, 2048
      %41 = vsyncadd [#allocation6], %s40
      %s42 = sshll.u32 [#allocation7], 4
      %s43 = int_to_ptr.vmem [resolvable:$true] %s42
      %48 = dma.hbm_to_vmem [thread:$0]  %s3, 2048, %s43, [#allocation6], 128, 128, 8
    $region17: #{tpu_custom_call.1} parent=1 // pred_fallthru
      _
    // Predicated region
    $region18: #{tpu_custom_call.1} parent=1 // pred_check
      _
    $region19: #{tpu_custom_call.1} parent=1 // pred_check_branch
      %50 = sbr.rel (0) target = $region21
    $region20: #{tpu_custom_call.1} parent=1 // pred_region
      _
    $region21: #{tpu_custom_call.1} parent=1 // pred_fallthru
      _
    // Predicated region
    $region22: #{tpu_custom_call.1} parent=1 // pred_check
      _
    $region23: #{tpu_custom_call.1} parent=1 // pred_check_branch
      %52 = sbr.rel (0) target = $region25
    $region24: #{tpu_custom_call.1} parent=1 // pred_region
      %53 = dma.done [#allocation3], 256
    $region25: #{tpu_custom_call.1} parent=1 // pred_fallthru
      _
    // Predicated region
    $region26: #{tpu_custom_call.1} parent=1 // pred_check
      _
    $region27: #{tpu_custom_call.1} parent=1 // pred_check_branch
      %55 = sbr.rel (0) target = $region29
    $region28: #{tpu_custom_call.1} parent=1 // pred_region
      %56 = dma.done [#allocation6], 4096
    $region29: #{tpu_custom_call.1} parent=1 // pred_fallthru
      _
    // Predicated region
    $region30: #{tpu_custom_call.1} parent=1 // pred_check
      _
    $region31: #{tpu_custom_call.1} parent=1 // pred_check_branch
      %58 = sbr.rel (0) target = $region33
    $region32: #{tpu_custom_call.1} parent=1 // pred_region
      %59 = dma.done [#allocation6], 2048
    $region33: #{tpu_custom_call.1} parent=1 // pred_fallthru
      _
    %v60 = vld [vmem:[#allocation2] sm:$0xff]
    %v61 = vld [vmem:[#allocation2 + $0x8] sm:$0xff]
    %v62 = vld [vmem:[#allocation5] sm:$0xff]
    %v63 = vld [vmem:[#allocation5 + $0x8] sm:$0xff]
    %v64 = vld [vmem:[#allocation5 + $0x10] sm:$0xff]
    %v65 = vld [vmem:[#allocation5 + $0x18] sm:$0xff]
    %v66 = vld [vmem:[#allocation5 + $0x20] sm:$0xff]
    %v67 = vld [vmem:[#allocation5 + $0x28] sm:$0xff]
    %v68 = vld [vmem:[#allocation5 + $0x30] sm:$0xff]
    %v69 = vld [vmem:[#allocation5 + $0x38] sm:$0xff]
    %v70 = vld [vmem:[#allocation5 + $0x40] sm:$0xff]
    %v71 = vld [vmem:[#allocation5 + $0x48] sm:$0xff]
    %v72 = vld [vmem:[#allocation5 + $0x50] sm:$0xff]
    %v73 = vld [vmem:[#allocation5 + $0x58] sm:$0xff]
    %v74 = vld [vmem:[#allocation5 + $0x60] sm:$0xff]
    %v75 = vld [vmem:[#allocation5 + $0x68] sm:$0xff]
    %v76 = vld [vmem:[#allocation5 + $0x70] sm:$0xff]
    %v77 = vld [vmem:[#allocation5 + $0x78] sm:$0xff]
    %v78 = vld [vmem:[#allocation5 + $0x80] sm:$0xff]
    %v79 = vld [vmem:[#allocation5 + $0x88] sm:$0xff]
    %v80 = vld [vmem:[#allocation5 + $0x90] sm:$0xff]
    %v81 = vld [vmem:[#allocation5 + $0x98] sm:$0xff]
    %v82 = vld [vmem:[#allocation5 + $0xa0] sm:$0xff]
    %v83 = vld [vmem:[#allocation5 + $0xa8] sm:$0xff]
    %v84 = vld [vmem:[#allocation5 + $0xb0] sm:$0xff]
    %v85 = vld [vmem:[#allocation5 + $0xb8] sm:$0xff]
    %v86 = vld [vmem:[#allocation5 + $0xc0] sm:$0xff]
    %v87 = vld [vmem:[#allocation5 + $0xc8] sm:$0xff]
    %v88 = vld [vmem:[#allocation5 + $0xd0] sm:$0xff]
    %v89 = vld [vmem:[#allocation5 + $0xd8] sm:$0xff]
    %v90 = vld [vmem:[#allocation5 + $0xe0] sm:$0xff]
    %v91 = vld [vmem:[#allocation5 + $0xe8] sm:$0xff]
    %v92 = vld [vmem:[#allocation5 + $0xf0] sm:$0xff]
    %v93 = vld [vmem:[#allocation5 + $0xf8] sm:$0xff]
    %v94 = vld [vmem:[%s2] sm:$0x1]
    %v96 = vlaneseq
    %v97 = vshrl.u32 %v96, 7
    %v98 = vsub.s32 0, %v97
    %v99 = vrot.slane %v94, %v98
    %101 = vmatprep.subr.mxu0 0.0
    %102 = vmatpush1.msra.mxu0 %v77
    %103 = vmatprep.subr.mxu0 0.0
    %104 = vmatpush1.msra.mxu0 %v76
    %105 = vmatprep.subr.mxu0 0.0
    %106 = vmatpush1.msra.mxu0 %v75
    %107 = vmatprep.subr.mxu0 0.0
    %108 = vmatpush1.msra.mxu0 %v74
    %109 = vmatprep.subr.mxu0 0.0
    %110 = vmatpush1.msra.mxu0 %v73
    %111 = vmatprep.subr.mxu0 0.0
    %112 = vmatpush1.msra.mxu0 %v72
    %113 = vmatprep.subr.mxu0 0.0
    %114 = vmatpush1.msra.mxu0 %v71
    %115 = vmatprep.subr.mxu0 0.0
    %116 = vmatpush1.msra.mxu0 %v70
    %117 = vmatprep.subr.mxu0 0.0
    %118 = vmatpush1.msra.mxu0 %v69
    %119 = vmatprep.subr.mxu0 0.0
    %120 = vmatpush1.msra.mxu0 %v68
    %121 = vmatprep.subr.mxu0 0.0
    %122 = vmatpush1.msra.mxu0 %v67
    %123 = vmatprep.subr.mxu0 0.0
    %124 = vmatpush1.msra.mxu0 %v66
    %125 = vmatprep.subr.mxu0 0.0
    %126 = vmatpush1.msra.mxu0 %v65
    %127 = vmatprep.subr.mxu0 0.0
    %128 = vmatpush1.msra.mxu0 %v64
    %129 = vmatprep.subr.mxu0 0.0
    %130 = vmatpush1.msra.mxu0 %v63
    %131 = vmatprep.subr.mxu0 0.0
    %132 = vmatpush1.msra.mxu0 %v62
    %133 = vmatprep.subr.mxu0 0.0
    %134 = vmatpush2.msra.mxu0 %v93
    %135 = vmatprep.subr.mxu0 0.0
    %136 = vmatpush2.msra.mxu0 %v92
    %137 = vmatprep.subr.mxu0 0.0
    %138 = vmatpush2.msra.mxu0 %v91
    %139 = vmatprep.subr.mxu0 0.0
    %140 = vmatpush2.msra.mxu0 %v90
    %141 = vmatprep.subr.mxu0 0.0
    %142 = vmatpush2.msra.mxu0 %v89
    %143 = vmatprep.subr.mxu0 0.0
    %144 = vmatpush2.msra.mxu0 %v88
    %145 = vmatprep.subr.mxu0 0.0
    %146 = vmatpush2.msra.mxu0 %v87
    %147 = vmatprep.subr.mxu0 0.0
    %148 = vmatpush2.msra.mxu0 %v86
    %149 = vmatprep.subr.mxu0 0.0
    %150 = vmatpush2.msra.mxu0 %v85
    %151 = vmatprep.subr.mxu0 0.0
    %152 = vmatpush2.msra.mxu0 %v84
    %153 = vmatprep.subr.mxu0 0.0
    %154 = vmatpush2.msra.mxu0 %v83
    %155 = vmatprep.subr.mxu0 0.0
    %156 = vmatpush2.msra.mxu0 %v82
    %157 = vmatprep.subr.mxu0 0.0
    %158 = vmatpush2.msra.mxu0 %v81
    %159 = vmatprep.subr.mxu0 0.0
    %160 = vmatpush2.msra.mxu0 %v80
    %161 = vmatprep.subr.mxu0 0.0
    %162 = vmatpush2.msra.mxu0 %v79
    %163 = vmatprep.subr.mxu0 0.0
    %164 = vmatpush2.msra.mxu0 %v78
    %165 = vmatprep.mubr.f32.mxu0 %v61
    %166 = vmatmul.mubr.f32.gmra.mxu0 %v60
    %v167 = vpop.f32.mrf.mxu0
    %v168 = vadd.f32 %v99, %v167
    %v169 = vpop.f32.mrf.mxu0
    %170 = vdwg.mxu0
    %v171 = vmax.f32 %v168, 0.0
    %v172 = vld [vmem:[#allocation7] sm:$0xff]
    %v173 = vld [vmem:[#allocation7 + $0x8] sm:$0xff]
    %v174 = vld [vmem:[#allocation7 + $0x10] sm:$0xff]
    %v175 = vld [vmem:[#allocation7 + $0x18] sm:$0xff]
    %v176 = vld [vmem:[#allocation7 + $0x20] sm:$0xff]
    %v177 = vld [vmem:[#allocation7 + $0x28] sm:$0xff]
    %v178 = vld [vmem:[#allocation7 + $0x30] sm:$0xff]
    %v179 = vld [vmem:[#allocation7 + $0x38] sm:$0xff]
    %v180 = vld [vmem:[#allocation7 + $0x40] sm:$0xff]
    %v181 = vld [vmem:[#allocation7 + $0x48] sm:$0xff]
    %v182 = vld [vmem:[#allocation7 + $0x50] sm:$0xff]
    %v183 = vld [vmem:[#allocation7 + $0x58] sm:$0xff]
    %v184 = vld [vmem:[#allocation7 + $0x60] sm:$0xff]
    %v185 = vld [vmem:[#allocation7 + $0x68] sm:$0xff]
    %v186 = vld [vmem:[#allocation7 + $0x70] sm:$0xff]
    %v187 = vld [vmem:[#allocation7 + $0x78] sm:$0xff]
    %v188 = vld [vmem:[%s4] sm:$0x1]
    %v190 = vlaneseq
    %v191 = vshrl.u32 %v190, 7
    %v192 = vsub.s32 0, %v191
    %v193 = vrot.slane %v188, %v192
    %195 = vmatprep.subr.mxu0 0.0
    %196 = vmatpush1.msra.mxu0 %v187
    %197 = vmatprep.subr.mxu0 0.0
    %198 = vmatpush1.msra.mxu0 %v186
    %199 = vmatprep.subr.mxu0 0.0
    %200 = vmatpush1.msra.mxu0 %v185
    %201 = vmatprep.subr.mxu0 0.0
    %202 = vmatpush1.msra.mxu0 %v184
    %203 = vmatprep.subr.mxu0 0.0
    %204 = vmatpush1.msra.mxu0 %v183
    %205 = vmatprep.subr.mxu0 0.0
    %206 = vmatpush1.msra.mxu0 %v182
    %207 = vmatprep.subr.mxu0 0.0
    %208 = vmatpush1.msra.mxu0 %v181
    %209 = vmatprep.subr.mxu0 0.0
    %210 = vmatpush1.msra.mxu0 %v180
    %211 = vmatprep.subr.mxu0 0.0
    %212 = vmatpush1.msra.mxu0 %v179
    %213 = vmatprep.subr.mxu0 0.0
    %214 = vmatpush1.msra.mxu0 %v178
    %215 = vmatprep.subr.mxu0 0.0
    %216 = vmatpush1.msra.mxu0 %v177
    %217 = vmatprep.subr.mxu0 0.0
    %218 = vmatpush1.msra.mxu0 %v176
    %219 = vmatprep.subr.mxu0 0.0
    %220 = vmatpush1.msra.mxu0 %v175
    %221 = vmatprep.subr.mxu0 0.0
    %222 = vmatpush1.msra.mxu0 %v174
    %223 = vmatprep.subr.mxu0 0.0
    %224 = vmatpush1.msra.mxu0 %v173
    %225 = vmatprep.subr.mxu0 0.0
    %226 = vmatpush1.msra.mxu0 %v172
    %227 = vmatprep.subr.mxu0 0.0
    %228 = vmatpush2.msra.mxu0 0.0
    %229 = vmatprep.subr.mxu0 0.0
    %230 = vmatpush2.msra.mxu0 0.0
    %231 = vmatprep.subr.mxu0 0.0
    %232 = vmatpush2.msra.mxu0 0.0
    %233 = vmatprep.subr.mxu0 0.0
    %234 = vmatpush2.msra.mxu0 0.0
    %235 = vmatprep.subr.mxu0 0.0
    %236 = vmatpush2.msra.mxu0 0.0
    %237 = vmatprep.subr.mxu0 0.0
    %238 = vmatpush2.msra.mxu0 0.0
    %239 = vmatprep.subr.mxu0 0.0
    %240 = vmatpush2.msra.mxu0 0.0
    %241 = vmatprep.subr.mxu0 0.0
    %242 = vmatpush2.msra.mxu0 0.0
    %243 = vmatprep.subr.mxu0 0.0
    %244 = vmatpush2.msra.mxu0 0.0
    %245 = vmatprep.subr.mxu0 0.0
    %246 = vmatpush2.msra.mxu0 0.0
    %247 = vmatprep.subr.mxu0 0.0
    %248 = vmatpush2.msra.mxu0 0.0
    %249 = vmatprep.subr.mxu0 0.0
    %250 = vmatpush2.msra.mxu0 0.0
    %251 = vmatprep.subr.mxu0 0.0
    %252 = vmatpush2.msra.mxu0 0.0
    %253 = vmatprep.subr.mxu0 0.0
    %254 = vmatpush2.msra.mxu0 0.0
    %255 = vmatprep.subr.mxu0 0.0
    %256 = vmatpush2.msra.mxu0 0.0
    %257 = vmatprep.subr.mxu0 0.0
    %258 = vmatpush2.msra.mxu0 0.0
    %259 = vmatprep.mubr.f32.mxu0 0.0
    %260 = vmatmul.mubr.f32.gmra.mxu0 %v171
    %v261 = vpop.f32.mrf.mxu0
    %v262 = vadd.f32 %v193, %v261
    %v263 = vpop.f32.mrf.mxu0
    %264 = vdwg.mxu0
    %265 = vst [vmem:[#allocation8] sm:$0xff] %v262
    // Predicated region
    $region34: #{tpu_custom_call.1} parent=1 // pred_check
      _
    $region35: #{tpu_custom_call.1} parent=1 // pred_check_branch
      %267 = sbr.rel (0) target = $region37
    $region36: #{tpu_custom_call.1} parent=1 // pred_region
      %s269 = ssub.s32 128, 128
      %270 = vsyncadd [#allocation4], %s269
      %s272 = sshll.u32 [#allocation8], 4
      %s273 = int_to_ptr.vmem [resolvable:$true] %s272
      %275 = dma.vmem_to_hbm [thread:$0]  %s273, 128, %s5, [#allocation4]
    $region37: #{tpu_custom_call.1} parent=1 // pred_fallthru
      _
    // Predicated region
    $region38: #{tpu_custom_call.1} parent=1 // pred_check
      _
    $region39: #{tpu_custom_call.1} parent=1 // pred_check_branch
      %277 = sbr.rel (0) target = $region41
    $region40: #{tpu_custom_call.1} parent=1 // pred_region
      %278 = dma.done [#allocation4], 128
    $region41: #{tpu_custom_call.1} parent=1 // pred_fallthru
      _
    %279 = vsyncpa [#allocation3], 1
    %280 = vsyncpa [#allocation6], 1
    %281 = vsyncpa [#allocation4], 1

</llo_original>
